<compile_context>
chip_gen: v6e
topology: v6e:2x2x1
jax: 0.10.0
libtpu: 0.0.40
codegen_flags: <defaults>
</compile_context>

<pallas_src>
import functools

import jax
import jax.numpy as jnp
from jax import lax
from jax.experimental import pallas as pl
from jax.experimental.pallas import tpu as pltpu


def _full_attention_kernel(q_ref, k_ref, v_ref, o_ref, acc_ref, *, score_dtype):
    # q_ref:   (1, tL, E)  head-major query tile
    # k_ref:   (1, tS, E)  head-major key tile
    # v_ref:   (1, tS, D)  head-major value tile
    # o_ref:   (1, tL, D)  output tile (same block across the S axis)
    # acc_ref: (tL, D) f32 scratch, resident across the S reduction axis
    si = pl.program_id(2)

    @pl.when(si == 0)
    def _init():
        acc_ref[...] = jnp.zeros_like(acc_ref)

    q = q_ref[0]  # (tL, E)
    k = k_ref[0]  # (tS, E)
    v = v_ref[0]  # (tS, D)

    # scores[l, s] = sum_e q[l, e] * k[s, e]   (single 2D MXU call, no k.T copy).
    # For bf16 inputs scores stay bf16 (MXU still accumulates f32 internally);
    # for f32 inputs scores are f32 and match an f32 reference path.
    scores = lax.dot_general(
        q, k,
        dimension_numbers=(((1,), (1,)), ((), ())),
        preferred_element_type=score_dtype)              # (tL, tS)

    # acc[l, d] += sum_s scores[l, s] * v[s, d]   (raw scores, per the module).
    acc_ref[...] += lax.dot_general(
        scores, v,
        dimension_numbers=(((1,), (0,)), ((), ())),
        preferred_element_type=jnp.float32)              # (tL, D) f32

    @pl.when(si == pl.num_programs(2) - 1)
    def _finalize():
        o_ref[0] = acc_ref[...].astype(o_ref.dtype)


def _valid_tiles(n):
    """Divisors of n satisfying the TPU sublane rule (multiple of 8, or == n),
    largest first."""
    return [t for t in range(n, 0, -1) if n % t == 0 and (t % 8 == 0 or t == n)]


def _vmem_limit_bytes():
    """Generation-aware VMEM limit (~75% of physical: ~96 MiB on v5e/v6e,
    ~48 MiB on v7x), with a conservative fallback if the query fails."""
    cap = 64 * 1024 * 1024
    try:
        cap = int(getattr(pltpu.get_tpu_info(), "vmem_capacity_bytes", cap))
    except Exception:
        pass
    return int(cap * 0.75)


def _plan_tiles(L, S, E, D, itemsize, score_bytes, budget, bh):
    """Pick (tL, tS).  Prefer tS == S (K/V DMA'd once per head); otherwise
    maximize tL (the K/V reuse factor), then tS.  Keeps >= 2 parallel grid
    steps when B*H == 1 so both v7x TensorCores get work."""

    def fits(tl, ts):
        need = (2 * (tl * E + ts * (E + D)) * itemsize   # double-buffered inputs
                + 2 * tl * D * itemsize                  # double-buffered output
                + tl * D * 4                             # f32 accumulator scratch
                + tl * ts * score_bytes)                 # scores temporary
        return need <= budget

    tl_all = _valid_tiles(L)
    ts_all = _valid_tiles(S)
    if bh == 1:
        smaller = [t for t in tl_all if t < L]
        if smaller:
            tl_all = smaller

    # Preferred: K/V fully VMEM-resident per (batch, head).
    for tl in tl_all:
        if fits(tl, S):
            return tl, S
    # Streaming fallback: largest tL first (K/V reuse), then largest tS.
    for tl in tl_all:
        for ts in ts_all:
            if fits(tl, ts):
                return tl, ts
    return tl_all[-1], ts_all[-1]


def full_attention(q, k, v):
    """q: [B, L, H, E], k: [B, S, H, E], v: [B, S, H, D] -> [B, H, L, D].

    Matches FullAttention.forward (mask_flag=False):
        out = einsum('bhls,bshd->bhld', einsum('blhe,bshe->bhls', q, k), v)
    """
    B, L, H, E = q.shape
    _, S, _, D = v.shape
    assert k.shape == (B, S, H, E) and v.shape == (B, S, H, D)

    dtype = q.dtype
    itemsize = jnp.dtype(dtype).itemsize
    score_dtype = jnp.bfloat16 if dtype == jnp.bfloat16 else jnp.float32
    score_bytes = jnp.dtype(score_dtype).itemsize

    vmem_limit = _vmem_limit_bytes()
    budget = int(vmem_limit * 0.8)          # headroom for compiler temporaries
    tL, tS = _plan_tiles(L, S, E, D, itemsize, score_bytes, budget, B * H)
    grid = (B * H, L // tL, S // tS)

    # One-time head-major relayout (cheap HBM copy) so each grid step is a
    # clean 2D MXU matmul and the output comes out directly in 'bhld'.
    qh = jnp.transpose(q, (0, 2, 1, 3)).reshape(B * H, L, E)
    kh = jnp.transpose(k, (0, 2, 1, 3)).reshape(B * H, S, E)
    vh = jnp.transpose(v, (0, 2, 1, 3)).reshape(B * H, S, D)

    kv_passes = 1 if tS == S else L // tL   # K/V re-stream factor
    flops = 2 * B * H * L * S * (E + D)
    bytes_accessed = ((qh.size + B * H * L * D) * itemsize
                      + kv_passes * (kh.size + vh.size) * itemsize)

    # TODO(synk): if D < 128 and a profile shows the output writeback exposed,
    # a lane-dense (tL, H*D) output layout (+ wrapper transpose) would avoid
    # masked stores; not done since it conflicts with head-major processing.
    # TODO(synk): on v5e, pipeline_mode=pl.Buffered(3) on the k/v specs could
    # hide K/V DMA when tS < S; only worth it if a trace shows exposed DMA.
    out = pl.pallas_call(
        functools.partial(_full_attention_kernel, score_dtype=score_dtype),
        out_shape=jax.ShapeDtypeStruct((B * H, L, D), dtype),
        grid_spec=pltpu.PrefetchScalarGridSpec(
            num_scalar_prefetch=0,
            grid=grid,
            in_specs=[
                pl.BlockSpec((1, tL, E), lambda bh, li, si: (bh, li, 0)),
                pl.BlockSpec((1, tS, E), lambda bh, li, si: (bh, si, 0)),
                pl.BlockSpec((1, tS, D), lambda bh, li, si: (bh, si, 0)),
            ],
            out_specs=pl.BlockSpec((1, tL, D), lambda bh, li, si: (bh, li, 0)),
            scratch_shapes=[pltpu.VMEM((tL, D), jnp.float32)],
        ),
        compiler_params=pltpu.CompilerParams(
            dimension_semantics=("parallel", "parallel", "arbitrary"),
            vmem_limit_bytes=vmem_limit,
        ),
        cost_estimate=pl.CostEstimate(
            flops=flops, transcendentals=0, bytes_accessed=bytes_accessed),
    )(qh, kh, vh)
    return out.reshape(B, H, L, D)


def full_attention_ref(q, k, v):
    scores = jnp.einsum('blhe,bshe->bhls', q, k)
    return jnp.einsum('bhls,bshd->bhld', scores, v)


if __name__ == "__main__":
    B, L, S, H, E, D = 2, 8, 8, 4, 32, 32
    key = jax.random.PRNGKey(0)
    kq, kk, kv = jax.random.split(key, 3)
    q = jax.random.normal(kq, (B, L, H, E), dtype=jnp.float32)
    k = jax.random.normal(kk, (B, S, H, E), dtype=jnp.float32)
    v = jax.random.normal(kv, (B, S, H, D), dtype=jnp.float32)

    out = full_attention(q, k, v)
    jax.block_until_ready(out)
    ref = full_attention_ref(q, k, v)
    assert out.shape == (B, H, L, D)
    assert jnp.allclose(out, ref, atol=1e-4, rtol=1e-4)

    # bf16 path (scores kept in bf16 on the MXU, f32 accumulation).
    qb, kb, vb = (x.astype(jnp.bfloat16) for x in (q, k, v))
    out_bf16 = full_attention(qb, kb, vb)
    jax.block_until_ready(out_bf16)
    ref_bf16 = full_attention_ref(qb.astype(jnp.float32),
                                  kb.astype(jnp.float32),
                                  vb.astype(jnp.float32))
    assert out_bf16.dtype == jnp.bfloat16
    assert jnp.allclose(out_bf16.astype(jnp.float32), ref_bf16, atol=0.5, rtol=0.1)

    print("KERNEL_OK")
</pallas_src>

<mosaic_0001>
module attributes {stable_mosaic.version = 11 : i64} {
  func.func @_full_attention_kernel(%arg0: i32, %arg1: i32, %arg2: i32, %arg3: memref<1x8x32xf32, #tpu.memory_space<vmem>>, %arg4: memref<1x8x32xf32, #tpu.memory_space<vmem>>, %arg5: memref<1x8x32xf32, #tpu.memory_space<vmem>>, %arg6: memref<1x8x32xf32, #tpu.memory_space<vmem>>, %arg7: memref<8x32xf32, #tpu.memory_space<vmem>>) attributes {dimension_semantics = [#tpu.dimension_semantics<parallel>, #tpu.dimension_semantics<parallel>, #tpu.dimension_semantics<arbitrary>], iteration_bounds = array<i64: 8, 1, 1>, scalar_prefetch = 0 : i64, scratch_operands = 1 : i64, tpu.core_type = #tpu.core_type<tc>, window_params = [{transform_indices = @transform_0, window_bounds = array<i64: 1, 8, 32>}, {transform_indices = @transform_1, window_bounds = array<i64: 1, 8, 32>}, {transform_indices = @transform_2, window_bounds = array<i64: 1, 8, 32>}, {transform_indices = @transform_3, window_bounds = array<i64: 1, 8, 32>}]} {
    %c0_i32 = arith.constant 0 : i32
    %0 = arith.cmpi eq, %arg2, %c0_i32 : i32
    %1 = arith.extui %0 : i1 to i32
    %c0_i32_0 = arith.constant 0 : i32
    %2 = arith.cmpi ne, %1, %c0_i32_0 : i32
    scf.if %2 {
      %cst_16 = arith.constant 0.000000e+00 : f32
      %17 = vector.broadcast %cst_16 : f32 to vector<8x32xf32>
      %c0_17 = arith.constant 0 : index
      %c0_18 = arith.constant 0 : index
      %18 = vector.load %arg7[%c0_17, %c0_18] : memref<8x32xf32, #tpu.memory_space<vmem>>, vector<8x32xf32>
      tpu.vector_store %arg7[%c0_17, %c0_18], %17 {strides = array<i32>} : memref<8x32xf32, #tpu.memory_space<vmem>>, vector<8x32xf32>,
    } else {
    }
    %c0 = arith.constant 0 : index
    %c0_1 = arith.constant 0 : index
    %c0_2 = arith.constant 0 : index
    %3 = vector.load %arg3[%c0, %c0_1, %c0_2] : memref<1x8x32xf32, #tpu.memory_space<vmem>>, vector<1x8x32xf32>
    %4 = vector.shape_cast %3 : vector<1x8x32xf32> to vector<8x32xf32>
    %c0_3 = arith.constant 0 : index
    %c0_4 = arith.constant 0 : index
    %c0_5 = arith.constant 0 : index
    %5 = vector.load %arg4[%c0_3, %c0_4, %c0_5] : memref<1x8x32xf32, #tpu.memory_space<vmem>>, vector<1x8x32xf32>
    %6 = vector.shape_cast %5 : vector<1x8x32xf32> to vector<8x32xf32>
    %c0_6 = arith.constant 0 : index
    %c0_7 = arith.constant 0 : index
    %c0_8 = arith.constant 0 : index
    %7 = vector.load %arg5[%c0_6, %c0_7, %c0_8] : memref<1x8x32xf32, #tpu.memory_space<vmem>>, vector<1x8x32xf32>
    %8 = vector.shape_cast %7 : vector<1x8x32xf32> to vector<8x32xf32>
    %cst = arith.constant dense<0.000000e+00> : vector<8x8xf32>
    %9 = tpu.matmul %4, %6, %cst {dimension_numbers = #tpu.dot_dimension_numbers<[1], [1], [0], [0], [0, 0, 1, 0], [], []>} : vector<8x32xf32>, vector<8x32xf32>, vector<8x8xf32> -> vector<8x8xf32>
    %c0_9 = arith.constant 0 : index
    %c0_10 = arith.constant 0 : index
    %10 = vector.load %arg7[%c0_9, %c0_10] : memref<8x32xf32, #tpu.memory_space<vmem>>, vector<8x32xf32>
    %cst_11 = arith.constant dense<0.000000e+00> : vector<8x32xf32>
    %11 = tpu.matmul %9, %8, %cst_11 {dimension_numbers = #tpu.dot_dimension_numbers<[1], [0], [0], [1], [0, 0, 1, 1], [], []>} : vector<8x8xf32>, vector<8x32xf32>, vector<8x32xf32> -> vector<8x32xf32>
    %12 = arith.addf %10, %11 : vector<8x32xf32>
    %c0_12 = arith.constant 0 : index
    %c0_13 = arith.constant 0 : index
    %13 = vector.load %arg7[%c0_12, %c0_13] : memref<8x32xf32, #tpu.memory_space<vmem>>, vector<8x32xf32>
    tpu.vector_store %arg7[%c0_12, %c0_13], %12 {strides = array<i32>} : memref<8x32xf32, #tpu.memory_space<vmem>>, vector<8x32xf32>,
    %c0_i32_14 = arith.constant 0 : i32
    %14 = arith.cmpi eq, %arg2, %c0_i32_14 : i32
    %15 = arith.extui %14 : i1 to i32
    %c0_i32_15 = arith.constant 0 : i32
    %16 = arith.cmpi ne, %15, %c0_i32_15 : i32
    scf.if %16 {
      %c0_16 = arith.constant 0 : index
      %c0_17 = arith.constant 0 : index
      %17 = vector.load %arg7[%c0_16, %c0_17] : memref<8x32xf32, #tpu.memory_space<vmem>>, vector<8x32xf32>
      %c0_18 = arith.constant 0 : index
      %c0_19 = arith.constant 0 : index
      %c0_20 = arith.constant 0 : index
      %18 = vector.load %arg6[%c0_18, %c0_19, %c0_20] : memref<1x8x32xf32, #tpu.memory_space<vmem>>, vector<1x8x32xf32>
      %19 = vector.shape_cast %18 : vector<1x8x32xf32> to vector<8x32xf32>
      %20 = vector.shape_cast %17 : vector<8x32xf32> to vector<1x8x32xf32>
      tpu.vector_store %arg6[%c0_18, %c0_19, %c0_20], %20 {strides = array<i32>} : memref<1x8x32xf32, #tpu.memory_space<vmem>>, vector<1x8x32xf32>,
    } else {
    }
    return
  }
  func.func @transform_0(%arg0: i32, %arg1: i32, %arg2: i32) -> (i32, i32, i32) {
    %c0_i32 = arith.constant 0 : i32
    %c0_i32_0 = arith.constant 0 : i32
    return %arg0, %arg1, %c0_i32 : i32, i32, i32
  }
  func.func @transform_1(%arg0: i32, %arg1: i32, %arg2: i32) -> (i32, i32, i32) {
    %c0_i32 = arith.constant 0 : i32
    %c0_i32_0 = arith.constant 0 : i32
    return %arg0, %arg2, %c0_i32 : i32, i32, i32
  }
  func.func @transform_2(%arg0: i32, %arg1: i32, %arg2: i32) -> (i32, i32, i32) {
    %c0_i32 = arith.constant 0 : i32
    %c0_i32_0 = arith.constant 0 : i32
    return %arg0, %arg2, %c0_i32 : i32, i32, i32
  }
  func.func @transform_3(%arg0: i32, %arg1: i32, %arg2: i32) -> (i32, i32, i32) {
    %c0_i32 = arith.constant 0 : i32
    %c0_i32_0 = arith.constant 0 : i32
    return %arg0, %arg1, %c0_i32 : i32, i32, i32
  }
}

</mosaic_0001>

<llo_original>
// kernel: tpu_custom_call.1
$region0: #{tpu_custom_call.1}
  #allocation0 [shape = 'u32[]', space=smem, size = 0x4, offset = 0x4, fixed_abs, tag = 'smem constant byte address 0x4 - core index']
  #allocation1 [shape = 'u32[144,128]{1,0:T(1,128)}', space=vmem, size = 0x12000, scoped, tag = 'internal scratch']
  #allocation2 [shape = 'f32[8,32]{1,0:T(8,128)}', space=vmem, size = 0x1000, scoped, tag = 'scratch operand']
  %s0 = inlined_call_operand.hbm [shape: f32[8,8,32], index: 0, kind: input, shape index: {}]
  %s1 = inlined_call_operand.hbm [shape: f32[8,8,32], index: 1, kind: input, shape index: {}]
  %s2 = inlined_call_operand.hbm [shape: f32[8,8,32], index: 2, kind: input, shape index: {}]
  %s3 = inlined_call_operand.hbm [shape: f32[8,8,32], index: 3, kind: output, shape index: {}]
  %s4 = sld [smem:[#allocation0]]
  $region65: #{tpu_custom_call.1} parent=0
    _
  %s6 = ssub.s32 1, %s4
  %s7 = scalar_select 0, %s6, %s4
  $region1: #{tpu_custom_call.1} parent=0
    #allocation3 [shape = 'u8[8192]{0}', space=vmem, size = 0x2000, scoped, tag = 'input window, operand 0']
    #allocation4 [shape = 's32[2]{0}', space=sflag, size = 0x8, scoped, tag = 'scoped memory for tpu_custom_call.1']
    #allocation5 [shape = 's32[2]{0}', space=sflag, size = 0x8, scoped, tag = 'scoped memory for tpu_custom_call.1']
    #allocation6 [shape = 'u8[8192]{0}', space=vmem, size = 0x2000, scoped, tag = 'input window, operand 1']
    #allocation7 [shape = 's32[2]{0}', space=sflag, size = 0x8, scoped, tag = 'scoped memory for tpu_custom_call.1']
    #allocation8 [shape = 'u8[8192]{0}', space=vmem, size = 0x2000, scoped, tag = 'input window, operand 2']
    #allocation9 [shape = 'u8[8192]{0}', space=vmem, size = 0x2000, scoped, tag = 'output window, operand 0']
    %8 = vsyncpa [#allocation4], 0
    %s9 = scalar_lea.sflag [#allocation4], 1
    %10 = vsyncpa %s9, 0
    %11 = vsyncpa [#allocation7], 0
    %s12 = scalar_lea.sflag [#allocation7], 1
    %13 = vsyncpa %s12, 0
    %14 = vsyncpa [#allocation5], 0
    %s15 = scalar_lea.sflag [#allocation5], 1
    %16 = vsyncpa %s15, 0
    loop: start=0, step=1, limit=10
    $region2: #{tpu_custom_call.1} parent=1 // loop_pre_header
      _
    $region3: #{tpu_custom_call.1} parent=1 // loop_header
      %s18 = sphi 0, %s22
      %p19 = scmp.ge.s32.totalorder %s18, 10
      %s25 = sphi 0, %s44
      %s26 = sphi 0, %s40
      %s27 = sphi 0, %s36
      %s28 = sphi 0, %s25
      %s29 = sphi 0, %s26
      %s30 = sphi 0, %s27
      %s31 = sphi 0, %s28
      %s32 = sphi 0, %s29
      %s33 = sphi 0, %s30
      %s49 = sphi 0, %s51
      %s52 = sphi 0, %s49
      %s53 = sphi 0, %s52
      %s69 = sphi 0, %s53
      %s77 = sphi 0, %s79
      %s80 = sphi 0, %s77
      %s81 = sphi 0, %s80
      %s97 = sphi 0, %s81
      %s105 = sphi 0, %s107
      %s108 = sphi 0, %s105
      %s109 = sphi 0, %s108
      %s125 = sphi 0, %s109
      %s133 = sphi 0, %s135
      %s136 = sphi 0, %s133
      %s137 = sphi 0, %s136
      %s153 = sphi 0, %s137
    $region4: #{tpu_custom_call.1} parent=1 // loop_header_branch
      %21 = sbr.rel (%p19) target = $region8
    $region5: #{tpu_custom_call.1} parent=1 // loop_body
      %s23 = ssub.s32 %s18, 1
      %s24 = ssub.s32 %s18, 2
      %s34 = sadd.s32 1, %s27
      %p35 = scmp.ge.s32.totalorder %s34, 1
      %s36 = scalar_select %p35, 0, %s34
      %s37 = sadd.s32 1, %s26
      %s38 = scalar_select %p35, %s37, %s26
      %p39 = scmp.ge.s32.totalorder %s38, 1
      %s40 = scalar_select %p39, 0, %s38
      %s41 = sadd.s32 1, %s25
      %s42 = scalar_select %p39, %s41, %s25
      %p43 = scmp.ge.s32.totalorder %s42, 8
      %s44 = scalar_select %p43, 0, %s42
      %s45 = ssub.s32 %s25, %s44
      %s46 = ssub.s32 %s26, %s40
      %s47 = sor.u32 %s45, %s46
      %p48 = scmp.eq.s32.totalorder %s47, 0
      %s50 = sadd.s32 %s49, 1
      %s51 = scalar_select %p48, %s49, %s50
      %p54 = pneg %p48
      %p55 = scmp.eq.s32.totalorder %s18, 7
      %p56 = por %p54, %p55
      %p57 = scmp.ne.s32.totalorder %s49, %s52
      %p58 = scmp.eq.s32.totalorder %s18, 0
      %p59 = por %p57, %p58
      %p60 = scmp.ne.s32.totalorder %s49, %s52
      %p61 = scmp.eq.s32.totalorder %s23, 7
      %p62 = por %p60, %p61
      %p63 = scmp.ne.s32.totalorder %s52, %s53
      %p64 = scmp.eq.s32.totalorder %s23, 0
      %p65 = por %p63, %p64
      %p66 = scmp.ne.s32.totalorder %s52, %s53
      %p67 = scmp.eq.s32.totalorder %s24, 7
      %p68 = por %p66, %p67
      %p70 = scmp.ne.s32.totalorder %s53, %s69
      %p71 = scmp.eq.s32.totalorder %s24, 0
      %p72 = por %p70, %p71
      %s73 = ssub.s32 %s25, %s44
      %s74 = ssub.s32 %s27, %s36
      %s75 = sor.u32 %s73, %s74
      %p76 = scmp.eq.s32.totalorder %s75, 0
      %s78 = sadd.s32 %s77, 1
      %s79 = scalar_select %p76, %s77, %s78
      %p82 = pneg %p76
      %p83 = scmp.eq.s32.totalorder %s18, 7
      %p84 = por %p82, %p83
      %p85 = scmp.ne.s32.totalorder %s77, %s80
      %p86 = scmp.eq.s32.totalorder %s18, 0
      %p87 = por %p85, %p86
      %p88 = scmp.ne.s32.totalorder %s77, %s80
      %p89 = scmp.eq.s32.totalorder %s23, 7
      %p90 = por %p88, %p89
      %p91 = scmp.ne.s32.totalorder %s80, %s81
      %p92 = scmp.eq.s32.totalorder %s23, 0
      %p93 = por %p91, %p92
      %p94 = scmp.ne.s32.totalorder %s80, %s81
      %p95 = scmp.eq.s32.totalorder %s24, 7
      %p96 = por %p94, %p95
      %p98 = scmp.ne.s32.totalorder %s81, %s97
      %p99 = scmp.eq.s32.totalorder %s24, 0
      %p100 = por %p98, %p99
      %s101 = ssub.s32 %s25, %s44
      %s102 = ssub.s32 %s27, %s36
      %s103 = sor.u32 %s101, %s102
      %p104 = scmp.eq.s32.totalorder %s103, 0
      %s106 = sadd.s32 %s105, 1
      %s107 = scalar_select %p104, %s105, %s106
      %p110 = pneg %p104
      %p111 = scmp.eq.s32.totalorder %s18, 7
      %p112 = por %p110, %p111
      %p113 = scmp.ne.s32.totalorder %s105, %s108
      %p114 = scmp.eq.s32.totalorder %s18, 0
      %p115 = por %p113, %p114
      %p116 = scmp.ne.s32.totalorder %s105, %s108
      %p117 = scmp.eq.s32.totalorder %s23, 7
      %p118 = por %p116, %p117
      %p119 = scmp.ne.s32.totalorder %s108, %s109
      %p120 = scmp.eq.s32.totalorder %s23, 0
      %p121 = por %p119, %p120
      %p122 = scmp.ne.s32.totalorder %s108, %s109
      %p123 = scmp.eq.s32.totalorder %s24, 7
      %p124 = por %p122, %p123
      %p126 = scmp.ne.s32.totalorder %s109, %s125
      %p127 = scmp.eq.s32.totalorder %s24, 0
      %p128 = por %p126, %p127
      %s129 = ssub.s32 %s25, %s44
      %s130 = ssub.s32 %s26, %s40
      %s131 = sor.u32 %s129, %s130
      %p132 = scmp.eq.s32.totalorder %s131, 0
      %s134 = sadd.s32 %s133, 1
      %s135 = scalar_select %p132, %s133, %s134
      %p138 = pneg %p132
      %p139 = scmp.eq.s32.totalorder %s18, 7
      %p140 = por %p138, %p139
      %p141 = scmp.ne.s32.totalorder %s133, %s136
      %p142 = scmp.eq.s32.totalorder %s18, 0
      %p143 = por %p141, %p142
      %p144 = scmp.ne.s32.totalorder %s133, %s136
      %p145 = scmp.eq.s32.totalorder %s23, 7
      %p146 = por %p144, %p145
      %p147 = scmp.ne.s32.totalorder %s136, %s137
      %p148 = scmp.eq.s32.totalorder %s23, 0
      %p149 = por %p147, %p148
      %p150 = scmp.ne.s32.totalorder %s136, %s137
      %p151 = scmp.eq.s32.totalorder %s24, 7
      %p152 = por %p150, %p151
      %p154 = scmp.ne.s32.totalorder %s137, %s153
      %p155 = scmp.eq.s32.totalorder %s24, 0
      %p156 = por %p154, %p155
      %p157 = scmp.le.s32.totalorder 1, %s18
      %p158 = scmp.lt.s32.totalorder %s18, 9
      %p159 = pnand %p157, %p158
      %p160 = pneg %p159
      // Predicated region
      $region9: #{tpu_custom_call.1} parent=5 // pred_check
        _
      $region10: #{tpu_custom_call.1} parent=5 // pred_check_branch
        %162 = sbr.rel (%p159) target = $region12
      $region11: #{tpu_custom_call.1} parent=5 // pred_region
        %s163 = ssub.s32 %s18, 1
      $region12: #{tpu_custom_call.1} parent=5 // pred_fallthru
        _
      %p164 = scmp.lt.s32.totalorder %s18, 8
      // Predicated region
      $region13: #{tpu_custom_call.1} parent=5 // pred_check
        %p165 = pneg %p164
      $region14: #{tpu_custom_call.1} parent=5 // pred_check_branch
        %167 = sbr.rel (%p165) target = $region16
      $region15: #{tpu_custom_call.1} parent=5 // pred_region
        // Predicated region
        $region17: #{tpu_custom_call.1} parent=15 // pred_check
          %p168 = pneg %p59
        $region18: #{tpu_custom_call.1} parent=15 // pred_check_branch
          %170 = sbr.rel (%p168) target = $region20
        $region19: #{tpu_custom_call.1} parent=15 // pred_region
          %s171 = sand.u32 %s49, 1
          %s172 = scalar_lea.sflag [#allocation4], %s171
          %s173 = sand.u32 %s49, 1
          %s174 = smul.addr %s173, 8
          %s175 = scalar_lea.vmem [#allocation3], %s174
          %s177 = ssub.s32 128, 128
          %178 = vsyncadd %s172, %s177
          %s179 = sadd.s32 %s26, %s25
          %s180 = smul.addr %s179, 128
          %s181 = scalar_lea.hbm %s0, %s180
          %s183 = sshll.u32 %s175, 4
          %s184 = int_to_ptr.vmem [resolvable:$true] %s183
          %186 = dma.hbm_to_vmem [thread:$0]  %s181, 128, %s184, %s172
        $region20: #{tpu_custom_call.1} parent=15 // pred_fallthru
          _
        // Predicated region
        $region21: #{tpu_custom_call.1} parent=15 // pred_check
          %p187 = pneg %p87
        $region22: #{tpu_custom_call.1} parent=15 // pred_check_branch
          %189 = sbr.rel (%p187) target = $region24
        $region23: #{tpu_custom_call.1} parent=15 // pred_region
          %s190 = sand.u32 %s18, 1
          %s191 = scalar_lea.sflag [#allocation7], %s190
          %s192 = sand.u32 %s77, 1
          %s193 = smul.addr %s192, 8
          %s194 = scalar_lea.vmem [#allocation6], %s193
          %s196 = ssub.s32 128, 128
          %197 = vsyncadd %s191, %s196
          %s198 = sadd.s32 %s27, %s25
          %s199 = smul.addr %s198, 128
          %s200 = scalar_lea.hbm %s1, %s199
          %s202 = sshll.u32 %s194, 4
          %s203 = int_to_ptr.vmem [resolvable:$true] %s202
          %205 = dma.hbm_to_vmem [thread:$0]  %s200, 128, %s203, %s191
        $region24: #{tpu_custom_call.1} parent=15 // pred_fallthru
          _
        // Predicated region
        $region25: #{tpu_custom_call.1} parent=15 // pred_check
          %p206 = pneg %p115
        $region26: #{tpu_custom_call.1} parent=15 // pred_check_branch
          %208 = sbr.rel (%p206) target = $region28
        $region27: #{tpu_custom_call.1} parent=15 // pred_region
          %s209 = sand.u32 %s18, 1
          %s210 = scalar_lea.sflag [#allocation7], %s209
          %s211 = sand.u32 %s105, 1
          %s212 = smul.addr %s211, 8
          %s213 = scalar_lea.vmem [#allocation8], %s212
          %s215 = ssub.s32 128, 128
          %216 = vsyncadd %s210, %s215
          %s217 = sadd.s32 %s27, %s25
          %s218 = smul.addr %s217, 128
          %s219 = scalar_lea.hbm %s2, %s218
          %s221 = sshll.u32 %s213, 4
          %s222 = int_to_ptr.vmem [resolvable:$true] %s221
          %224 = dma.hbm_to_vmem [thread:$0]  %s219, 128, %s222, %s210
        $region28: #{tpu_custom_call.1} parent=15 // pred_fallthru
          _
      $region16: #{tpu_custom_call.1} parent=5 // pred_fallthru
        _
      %p225 = scmp.le.s32.totalorder 1, %s18
      %p226 = scmp.lt.s32.totalorder %s18, 9
      %p227 = pnand %p225, %p226
      %p228 = pneg %p227
      // Predicated region
      $region29: #{tpu_custom_call.1} parent=5 // pred_check
        _
      $region30: #{tpu_custom_call.1} parent=5 // pred_check_branch
        %230 = sbr.rel (%p227) target = $region32
      $region31: #{tpu_custom_call.1} parent=5 // pred_region
        %s231 = ssub.s32 %s18, 1
        %s232 = sand.u32 %s52, 1
        %s233 = scalar_lea.sflag [#allocation4], %s232
        %s234 = sand.u32 %s52, 1
        %s235 = smul.addr %s234, 8
        %s236 = scalar_lea.vmem [#allocation3], %s235
        // Predicated region
        $region33: #{tpu_custom_call.1} parent=31 // pred_check
          %p237 = pneg %p65
        $region34: #{tpu_custom_call.1} parent=31 // pred_check_branch
          %239 = sbr.rel (%p237) target = $region36
        $region35: #{tpu_custom_call.1} parent=31 // pred_region
          %240 = dma.done %s233, 128
        $region36: #{tpu_custom_call.1} parent=31 // pred_fallthru
          _
        %s241 = sand.u32 %s23, 1
        %s242 = scalar_lea.sflag [#allocation7], %s241
        %s243 = sand.u32 %s80, 1
        %s244 = smul.addr %s243, 8
        %s245 = scalar_lea.vmem [#allocation6], %s244
        // Predicated region
        $region37: #{tpu_custom_call.1} parent=31 // pred_check
          %p246 = pneg %p93
        $region38: #{tpu_custom_call.1} parent=31 // pred_check_branch
          %248 = sbr.rel (%p246) target = $region40
        $region39: #{tpu_custom_call.1} parent=31 // pred_region
          %249 = dma.done %s242, 128
        $region40: #{tpu_custom_call.1} parent=31 // pred_fallthru
          _
        %s250 = sand.u32 %s23, 1
        %s251 = scalar_lea.sflag [#allocation7], %s250
        %s252 = sand.u32 %s108, 1
        %s253 = smul.addr %s252, 8
        %s254 = scalar_lea.vmem [#allocation8], %s253
        // Predicated region
        $region41: #{tpu_custom_call.1} parent=31 // pred_check
          %p255 = pneg %p121
        $region42: #{tpu_custom_call.1} parent=31 // pred_check_branch
          %257 = sbr.rel (%p255) target = $region44
        $region43: #{tpu_custom_call.1} parent=31 // pred_region
          %258 = dma.done %s251, 128
        $region44: #{tpu_custom_call.1} parent=31 // pred_fallthru
          _
        %s259 = sand.u32 %s52, 1
        %s260 = scalar_lea.sflag [#allocation4], %s259
        %s261 = sand.u32 %s52, 1
        %s262 = smul.addr %s261, 8
        %s263 = scalar_lea.vmem [#allocation3], %s262
        %p264 = pneg %p65
        %p265 = pneg %p62
        %s266 = sand.u32 %s23, 1
        %s267 = scalar_lea.sflag [#allocation7], %s266
        %s268 = sand.u32 %s80, 1
        %s269 = smul.addr %s268, 8
        %s270 = scalar_lea.vmem [#allocation6], %s269
        %p271 = pneg %p93
        %p272 = pneg %p90
        %s273 = sand.u32 %s23, 1
        %s274 = scalar_lea.sflag [#allocation7], %s273
        %s275 = sand.u32 %s108, 1
        %s276 = smul.addr %s275, 8
        %s277 = scalar_lea.vmem [#allocation8], %s276
        %p278 = pneg %p121
        %p279 = pneg %p118
        %p280 = pneg %p149
        %p281 = pneg %p146
        %s282 = sand.u32 %s136, 1
        %s283 = scalar_lea.sflag [#allocation5], %s282
        %s284 = sand.u32 %s136, 1
        %s285 = smul.addr %s284, 8
        %s286 = scalar_lea.vmem [#allocation9], %s285
        %p287 = scmp.eq.s32.totalorder %s30, 0
        // Predicated region
        $region45: #{tpu_custom_call.1} parent=31 // pred_check
          %p288 = pneg %p287
        $region46: #{tpu_custom_call.1} parent=31 // pred_check_branch
          %290 = sbr.rel (%p288) target = $region48
        $region47: #{tpu_custom_call.1} parent=31 // pred_region
          %vm291 = vcmask 261120
          %292 = vst.msk [vmem:[#allocation2] sm:$0xff] %vm291, 0.0
        $region48: #{tpu_custom_call.1} parent=31 // pred_fallthru
          _
        %v293 = vld [vmem:[%s236] sm:$0xff]
        %v294 = vld [vmem:[%s245] sm:$0xff]
        %v295 = vld [vmem:[%s254] sm:$0xff]
        %vm296 = vcmask 261120
        %v298 = vsel %vm296, %v293, 0
        %v301 = vsel %vm296, %v294, 0
        %303 = vmatprep.subr.mxu0 0.0
        %304 = vmatpush1.xpose.msra.mxu0 0.0
        %305 = vmatprep.subr.mxu0 0.0
        %306 = vmatpush1.xpose.msra.mxu0 0.0
        %307 = vmatprep.subr.mxu0 0.0
        %308 = vmatpush1.xpose.msra.mxu0 0.0
        %309 = vmatprep.subr.mxu0 0.0
        %310 = vmatpush1.xpose.msra.mxu0 0.0
        %311 = vmatprep.subr.mxu0 0.0
        %312 = vmatpush1.xpose.msra.mxu0 0.0
        %313 = vmatprep.subr.mxu0 0.0
        %314 = vmatpush1.xpose.msra.mxu0 0.0
        %315 = vmatprep.subr.mxu0 0.0
        %316 = vmatpush1.xpose.msra.mxu0 0.0
        %317 = vmatprep.subr.mxu0 0.0
        %318 = vmatpush1.xpose.msra.mxu0 0.0
        %319 = vmatprep.subr.mxu0 0.0
        %320 = vmatpush1.xpose.msra.mxu0 0.0
        %321 = vmatprep.subr.mxu0 0.0
        %322 = vmatpush1.xpose.msra.mxu0 0.0
        %323 = vmatprep.subr.mxu0 0.0
        %324 = vmatpush1.xpose.msra.mxu0 0.0
        %325 = vmatprep.subr.mxu0 0.0
        %326 = vmatpush1.xpose.msra.mxu0 0.0
        %327 = vmatprep.subr.mxu0 0.0
        %328 = vmatpush1.xpose.msra.mxu0 0.0
        %329 = vmatprep.subr.mxu0 0.0
        %330 = vmatpush1.xpose.msra.mxu0 0.0
        %331 = vmatprep.subr.mxu0 0.0
        %332 = vmatpush1.xpose.msra.mxu0 0.0
        %333 = vmatprep.subr.mxu0 0.0
        %334 = vmatpush1.xpose.msra.mxu0 %v301
        %335 = vmatprep.subr.mxu0 0.0
        %336 = vmatpush2.xpose.msra.mxu0 0.0
        %337 = vmatprep.subr.mxu0 0.0
        %338 = vmatpush2.xpose.msra.mxu0 0.0
        %339 = vmatprep.subr.mxu0 0.0
        %340 = vmatpush2.xpose.msra.mxu0 0.0
        %341 = vmatprep.subr.mxu0 0.0
        %342 = vmatpush2.xpose.msra.mxu0 0.0
        %343 = vmatprep.subr.mxu0 0.0
        %344 = vmatpush2.xpose.msra.mxu0 0.0
        %345 = vmatprep.subr.mxu0 0.0
        %346 = vmatpush2.xpose.msra.mxu0 0.0
        %347 = vmatprep.subr.mxu0 0.0
        %348 = vmatpush2.xpose.msra.mxu0 0.0
        %349 = vmatprep.subr.mxu0 0.0
        %350 = vmatpush2.xpose.msra.mxu0 0.0
        %351 = vmatprep.subr.mxu0 0.0
        %352 = vmatpush2.xpose.msra.mxu0 0.0
        %353 = vmatprep.subr.mxu0 0.0
        %354 = vmatpush2.xpose.msra.mxu0 0.0
        %355 = vmatprep.subr.mxu0 0.0
        %356 = vmatpush2.xpose.msra.mxu0 0.0
        %357 = vmatprep.subr.mxu0 0.0
        %358 = vmatpush2.xpose.msra.mxu0 0.0
        %359 = vmatprep.subr.mxu0 0.0
        %360 = vmatpush2.xpose.msra.mxu0 0.0
        %361 = vmatprep.subr.mxu0 0.0
        %362 = vmatpush2.xpose.msra.mxu0 0.0
        %363 = vmatprep.subr.mxu0 0.0
        %364 = vmatpush2.xpose.msra.mxu0 0.0
        %365 = vmatprep.subr.mxu0 0.0
        %366 = vmatpush2.xpose.msra.mxu0 0.0
        %367 = vmatprep.mubr.f32.mxu0 0.0
        %368 = vmatmul.mubr.f32.gmra.mxu0 %v298
        %v369 = vpop.f32.mrf.mxu0
        %v370 = vadd.f32 0.0, %v369
        %v371 = vpop.f32.mrf.mxu0
        %372 = vdwg.mxu0
        %v373 = vld [vmem:[#allocation2] sm:$0xff]
        %vm374 = vcmask 64512
        %v376 = vsel %vm374, %v370, 0
        %378 = vmatprep.subr.mxu0 0.0
        %379 = vmatpush1.msra.mxu0 0.0
        %380 = vmatprep.subr.mxu0 0.0
        %381 = vmatpush1.msra.mxu0 0.0
        %382 = vmatprep.subr.mxu0 0.0
        %383 = vmatpush1.msra.mxu0 0.0
        %384 = vmatprep.subr.mxu0 0.0
        %385 = vmatpush1.msra.mxu0 0.0
        %386 = vmatprep.subr.mxu0 0.0
        %387 = vmatpush1.msra.mxu0 0.0
        %388 = vmatprep.subr.mxu0 0.0
        %389 = vmatpush1.msra.mxu0 0.0
        %390 = vmatprep.subr.mxu0 0.0
        %391 = vmatpush1.msra.mxu0 0.0
        %392 = vmatprep.subr.mxu0 0.0
        %393 = vmatpush1.msra.mxu0 0.0
        %394 = vmatprep.subr.mxu0 0.0
        %395 = vmatpush1.msra.mxu0 0.0
        %396 = vmatprep.subr.mxu0 0.0
        %397 = vmatpush1.msra.mxu0 0.0
        %398 = vmatprep.subr.mxu0 0.0
        %399 = vmatpush1.msra.mxu0 0.0
        %400 = vmatprep.subr.mxu0 0.0
        %401 = vmatpush1.msra.mxu0 0.0
        %402 = vmatprep.subr.mxu0 0.0
        %403 = vmatpush1.msra.mxu0 0.0
        %404 = vmatprep.subr.mxu0 0.0
        %405 = vmatpush1.msra.mxu0 0.0
        %406 = vmatprep.subr.mxu0 0.0
        %407 = vmatpush1.msra.mxu0 0.0
        %408 = vmatprep.subr.mxu0 0.0
        %409 = vmatpush1.msra.mxu0 %v295
        %410 = vmatprep.subr.mxu0 0.0
        %411 = vmatpush2.msra.mxu0 0.0
        %412 = vmatprep.subr.mxu0 0.0
        %413 = vmatpush2.msra.mxu0 0.0
        %414 = vmatprep.subr.mxu0 0.0
        %415 = vmatpush2.msra.mxu0 0.0
        %416 = vmatprep.subr.mxu0 0.0
        %417 = vmatpush2.msra.mxu0 0.0
        %418 = vmatprep.subr.mxu0 0.0
        %419 = vmatpush2.msra.mxu0 0.0
        %420 = vmatprep.subr.mxu0 0.0
        %421 = vmatpush2.msra.mxu0 0.0
        %422 = vmatprep.subr.mxu0 0.0
        %423 = vmatpush2.msra.mxu0 0.0
        %424 = vmatprep.subr.mxu0 0.0
        %425 = vmatpush2.msra.mxu0 0.0
        %426 = vmatprep.subr.mxu0 0.0
        %427 = vmatpush2.msra.mxu0 0.0
        %428 = vmatprep.subr.mxu0 0.0
        %429 = vmatpush2.msra.mxu0 0.0
        %430 = vmatprep.subr.mxu0 0.0
        %431 = vmatpush2.msra.mxu0 0.0
        %432 = vmatprep.subr.mxu0 0.0
        %433 = vmatpush2.msra.mxu0 0.0
        %434 = vmatprep.subr.mxu0 0.0
        %435 = vmatpush2.msra.mxu0 0.0
        %436 = vmatprep.subr.mxu0 0.0
        %437 = vmatpush2.msra.mxu0 0.0
        %438 = vmatprep.subr.mxu0 0.0
        %439 = vmatpush2.msra.mxu0 0.0
        %440 = vmatprep.subr.mxu0 0.0
        %441 = vmatpush2.msra.mxu0 0.0
        %442 = vmatprep.mubr.f32.mxu0 0.0
        %443 = vmatmul.mubr.f32.gmra.mxu0 %v376
        %v444 = vpop.f32.mrf.mxu0
        %v445 = vadd.f32 0.0, %v444
        %v446 = vpop.f32.mrf.mxu0
        %447 = vdwg.mxu0
        %v448 = vadd.f32 %v373, %v445
        %449 = vst.msk [vmem:[#allocation2] sm:$0xff] %vm296, %v448
        // Predicated region
        $region49: #{tpu_custom_call.1} parent=31 // pred_check
          %p450 = pneg %p287
        $region50: #{tpu_custom_call.1} parent=31 // pred_check_branch
          %452 = sbr.rel (%p450) target = $region52
        $region51: #{tpu_custom_call.1} parent=31 // pred_region
          %v453 = vld [vmem:[#allocation2] sm:$0xff]
          %454 = vst.msk [vmem:[%s286] sm:$0xff] %vm296, %v453
        $region52: #{tpu_custom_call.1} parent=31 // pred_fallthru
          _
        %s455 = sand.u32 %s136, 1
        %s456 = scalar_lea.sflag [#allocation5], %s455
        %s457 = sand.u32 %s136, 1
        %s458 = smul.addr %s457, 8
        %s459 = scalar_lea.vmem [#allocation9], %s458
        // Predicated region
        $region53: #{tpu_custom_call.1} parent=31 // pred_check
          %p460 = pneg %p146
        $region54: #{tpu_custom_call.1} parent=31 // pred_check_branch
          %462 = sbr.rel (%p460) target = $region56
        $region55: #{tpu_custom_call.1} parent=31 // pred_region
          %s464 = ssub.s32 128, 128
          %465 = vsyncadd %s456, %s464
          %s466 = sadd.s32 %s29, %s28
          %s467 = smul.addr %s466, 128
          %s468 = scalar_lea.hbm %s3, %s467
          %s470 = sshll.u32 %s459, 4
          %s471 = int_to_ptr.vmem [resolvable:$true] %s470
          %473 = dma.vmem_to_hbm [thread:$0]  %s471, 128, %s468, %s456
        $region56: #{tpu_custom_call.1} parent=31 // pred_fallthru
          _
      $region32: #{tpu_custom_call.1} parent=5 // pred_fallthru
        _
      %p474 = scmp.le.s32.totalorder 2, %s18
      // Predicated region
      $region57: #{tpu_custom_call.1} parent=5 // pred_check
        %p475 = pneg %p474
      $region58: #{tpu_custom_call.1} parent=5 // pred_check_branch
        %477 = sbr.rel (%p475) target = $region60
      $region59: #{tpu_custom_call.1} parent=5 // pred_region
        %s478 = ssub.s32 %s18, 2
        // Predicated region
        $region61: #{tpu_custom_call.1} parent=59 // pred_check
          %p479 = pneg %p152
        $region62: #{tpu_custom_call.1} parent=59 // pred_check_branch
          %481 = sbr.rel (%p479) target = $region64
        $region63: #{tpu_custom_call.1} parent=59 // pred_region
          %s482 = sand.u32 %s137, 1
          %s483 = scalar_lea.sflag [#allocation5], %s482
          %s484 = sand.u32 %s137, 1
          %s485 = smul.addr %s484, 8
          %s486 = scalar_lea.vmem [#allocation9], %s485
          %487 = dma.done %s483, 128
        $region64: #{tpu_custom_call.1} parent=59 // pred_fallthru
          _
      $region60: #{tpu_custom_call.1} parent=5 // pred_fallthru
        _
    $region6: #{tpu_custom_call.1} parent=1 // loop_footer
      %s22 = sadd.s32 1, %s18
    $region7: #{tpu_custom_call.1} parent=1 // loop_footer_branch
      %17 = sbr.rel target = $region3
    $region8: #{tpu_custom_call.1} parent=1 // loop_exit
      _
    %488 = vsyncpa [#allocation4], 1
    %s489 = scalar_lea.sflag [#allocation4], 1
    %490 = vsyncpa %s489, 1
    %491 = vsyncpa [#allocation7], 1
    %s492 = scalar_lea.sflag [#allocation7], 1
    %493 = vsyncpa %s492, 1
    %494 = vsyncpa [#allocation5], 1
    %s495 = scalar_lea.sflag [#allocation5], 1
    %496 = vsyncpa %s495, 1

</llo_original>
